<compile_context>
chip_gen: v7x
topology: tpu7x:2x2x1
jax: 0.10.0
libtpu: 0.0.40
codegen_flags: <defaults>
</compile_context>

<pallas_src>
import functools
import math

import jax
import jax.numpy as jnp
from jax.experimental import pallas as pl
from jax.experimental.pallas import tpu as pltpu


# ----------------------------------------------------------------------------- helpers
def _gelu_tanh(x):
    c = math.sqrt(2.0 / math.pi)
    return 0.5 * x * (1.0 + jnp.tanh(c * (x + 0.044715 * x * x * x)))


def _layer_norm(x, gamma, beta, eps=1e-5):
    mu = jnp.mean(x, axis=-1, keepdims=True)
    xc = x - mu
    var = jnp.mean(xc * xc, axis=-1, keepdims=True)
    return xc * jax.lax.rsqrt(var + eps) * gamma + beta


# ----------------------------------------------------------------------------- kernels
def embed_kernel(ids_ref, emb_ref, pe_ref, o_ref, *, scale):
    # ids_ref lives in SMEM and is only used by the index_maps (gather).
    del ids_ref
    o_ref[...] = emb_ref[...] * scale + pe_ref[...]


def encoder_layer_kernel(x_ref, kbias_ref,
                         wq_ref, wk_ref, wv_ref, bq_ref, bk_ref, bv_ref,
                         wo_ref, bo_ref, g1_ref, be1_ref,
                         w1_ref, b1_ref, w2_ref, b2_ref, g2_ref, be2_ref,
                         gf_ref, bf_ref,
                         o_ref, *, nhead, sm_scale, apply_final_norm):
    x = x_ref[0]                       # (S, E) current batch element
    kbias = kbias_ref[0]               # (1, S) additive key-padding bias
    S, E = x.shape
    DH = E // nhead

    # ---- multi-head self-attention (pre-split QKV weights, no concatenates) ----
    q = jnp.dot(x, wq_ref[...], preferred_element_type=jnp.float32) + bq_ref[...]
    k = jnp.dot(x, wk_ref[...], preferred_element_type=jnp.float32) + bk_ref[...]
    v = jnp.dot(x, wv_ref[...], preferred_element_type=jnp.float32) + bv_ref[...]

    attn_out = jnp.zeros((S, E), jnp.float32)
    for h in range(nhead):                       # static unroll over heads
        lo, hi = h * DH, (h + 1) * DH
        qh, kh, vh = q[:, lo:hi], k[:, lo:hi], v[:, lo:hi]
        s = jax.lax.dot_general(qh, kh, (((1,), (1,)), ((), ())),
                                preferred_element_type=jnp.float32)      # (S, S)
        s = s * sm_scale + kbias
        s = s - jnp.max(s, axis=-1, keepdims=True)
        p = jnp.exp(s)
        p = p * pl.reciprocal(jnp.sum(p, axis=-1, keepdims=True), approx=True)
        ch = jnp.dot(p, vh, preferred_element_type=jnp.float32)          # (S, DH)
        # out-projection folded per head: sum_h ch @ Wo^T[h*DH:(h+1)*DH, :]
        attn_out = attn_out + jnp.dot(ch, wo_ref[lo:hi, :],
                                      preferred_element_type=jnp.float32)
    attn_out = attn_out + bo_ref[...]

    x = _layer_norm(x + attn_out, g1_ref[...], be1_ref[...])             # post-norm 1

    # ---- feed-forward (gelu) ----
    hff = jnp.dot(x, w1_ref[...], preferred_element_type=jnp.float32) + b1_ref[...]
    hff = _gelu_tanh(hff)
    x = _layer_norm(
        x + jnp.dot(hff, w2_ref[...], preferred_element_type=jnp.float32) + b2_ref[...],
        g2_ref[...], be2_ref[...])                                       # post-norm 2

    if apply_final_norm:                                                 # fused encoder_norm
        x = _layer_norm(x, gf_ref[...], bf_ref[...])
    o_ref[0] = x


# ----------------------------------------------------------------------------- wrappers
def embed_pallas(ids_bs, emb_table, pe_table):
    """ids_bs: (B, S) int32 -> (B, S, E) f32 = emb[ids]*sqrt(E) + pe[:S]."""
    B, S = ids_bs.shape
    V, E = emb_table.shape
    emb3 = emb_table.reshape(V, 1, E)            # (row, 1, E): blocks are full last-2 dims
    pe3 = pe_table.reshape(-1, 1, E)
    ids_flat = ids_bs.reshape(-1).astype(jnp.int32)
    kernel = functools.partial(embed_kernel, scale=math.sqrt(E))
    out = pl.pallas_call(
        kernel,
        out_shape=jax.ShapeDtypeStruct((B * S, 1, E), jnp.float32),
        grid_spec=pltpu.PrefetchScalarGridSpec(
            num_scalar_prefetch=1,
            grid=(B * S,),
            in_specs=[
                pl.BlockSpec((1, 1, E), lambda i, ids: (ids[i], 0, 0)),   # emb row gather
                pl.BlockSpec((1, 1, E), lambda i, ids: (i % S, 0, 0)),    # pos-enc row
            ],
            out_specs=pl.BlockSpec((1, 1, E), lambda i, ids: (i, 0, 0)),
        ),
        compiler_params=pltpu.CompilerParams(dimension_semantics=("arbitrary",)),
    )(ids_flat, emb3, pe3)
    return out.reshape(B, S, E)


def encoder_layer_pallas(x, kbias, lyr, gf, bf, *, nhead, apply_final_norm):
    B, S, E = x.shape
    F = lyr['w1_t'].shape[1]
    DH = E // nhead

    def full(r, c):
        return pl.BlockSpec((r, c), lambda b: (0, 0))    # weight: fetched once, VMEM-resident

    kernel = functools.partial(encoder_layer_kernel, nhead=nhead,
                               sm_scale=1.0 / math.sqrt(DH),
                               apply_final_norm=apply_final_norm)
    return pl.pallas_call(
        kernel,
        out_shape=jax.ShapeDtypeStruct((B, S, E), jnp.float32),
        grid=(B,),
        in_specs=[
            pl.BlockSpec((1, S, E), lambda b: (b, 0, 0)),   # x
            pl.BlockSpec((1, 1, S), lambda b: (b, 0, 0)),   # key-padding bias
            full(E, E), full(E, E), full(E, E),             # Wq^T, Wk^T, Wv^T
            full(1, E), full(1, E), full(1, E),             # bq, bk, bv
            full(E, E), full(1, E),                         # Wo^T, bo
            full(1, E), full(1, E),                         # norm1 gamma/beta
            full(E, F), full(1, F),                         # W1^T, b1
            full(F, E), full(1, E),                         # W2^T, b2
            full(1, E), full(1, E),                         # norm2 gamma/beta
            full(1, E), full(1, E),                         # final norm gamma/beta
        ],
        out_specs=pl.BlockSpec((1, S, E), lambda b: (b, 0, 0)),
        compiler_params=pltpu.CompilerParams(dimension_semantics=("parallel",)),
    )(x, kbias,
      lyr['wq_t'], lyr['wk_t'], lyr['wv_t'], lyr['bq'], lyr['bk'], lyr['bv'],
      lyr['wo_t'], lyr['bo'], lyr['g1'], lyr['be1'],
      lyr['w1_t'], lyr['b1'], lyr['w2_t'], lyr['b2'], lyr['g2'], lyr['be2'],
      gf, bf)


def transformer_encoder_forward(src_ids_sb, src_key_padding_mask, params, *, nhead=8):
    """src_ids_sb: [S, B] int (PyTorch seq-first), mask: [B, S] bool (True = pad).
    Returns [S, B, E] like the PyTorch module."""
    S, B = src_ids_sb.shape
    ids = jnp.transpose(src_ids_sb).astype(jnp.int32)            # tiny int transpose only
    x = embed_pallas(ids, params['emb'], params['pe'])           # (B, S, E)
    kbias = jnp.where(src_key_padding_mask, -1e9, 0.0).astype(jnp.float32).reshape(B, 1, S)
    n_layers = len(params['layers'])
    for li, lyr in enumerate(params['layers']):
        x = encoder_layer_pallas(x, kbias, lyr, params['gf'], params['bf'],
                                 nhead=nhead, apply_final_norm=(li == n_layers - 1))
    return jnp.transpose(x, (1, 0, 2))                           # back to PyTorch [S, B, E]


# ----------------------------------------------------------------------------- reference
def reference_forward(src_ids_sb, src_key_padding_mask, params, *, nhead=8):
    S, B = src_ids_sb.shape
    E = params['emb'].shape[1]
    DH = E // nhead
    ids = jnp.transpose(src_ids_sb).astype(jnp.int32)
    x = params['emb'][ids] * math.sqrt(E) + params['pe'][:S][None, :, :]
    bias = jnp.where(src_key_padding_mask, -1e9, 0.0)[:, None, None, :]    # (B,1,1,S)
    for lyr in params['layers']:
        q = (x @ lyr['wq_t'] + lyr['bq']).reshape(B, S, nhead, DH)
        k = (x @ lyr['wk_t'] + lyr['bk']).reshape(B, S, nhead, DH)
        v = (x @ lyr['wv_t'] + lyr['bv']).reshape(B, S, nhead, DH)
        s = jnp.einsum('bqhd,bkhd->bhqk', q, k) / math.sqrt(DH) + bias
        p = jax.nn.softmax(s, axis=-1)
        ctx = jnp.einsum('bhqk,bkhd->bqhd', p, v).reshape(B, S, E)
        attn = ctx @ lyr['wo_t'] + lyr['bo']
        x = _layer_norm(x + attn, lyr['g1'], lyr['be1'])
        h = _gelu_tanh(x @ lyr['w1_t'] + lyr['b1'])
        x = _layer_norm(x + h @ lyr['w2_t'] + lyr['b2'], lyr['g2'], lyr['be2'])
    x = _layer_norm(x, params['gf'], params['bf'])
    return jnp.transpose(x, (1, 0, 2))


# ----------------------------------------------------------------------------- params
def positional_encoding(max_len, E):
    position = jnp.arange(max_len, dtype=jnp.float32)[:, None]
    div_term = jnp.exp(jnp.arange(0, E, 2, dtype=jnp.float32) * (-math.log(10000.0) / E))
    pe = jnp.zeros((max_len, E), jnp.float32)
    pe = pe.at[:, 0::2].set(jnp.sin(position * div_term))
    pe = pe.at[:, 1::2].set(jnp.cos(position * div_term))
    return pe


def init_params(key, V, E, F, L, max_len):
    s = 0.05
    keys = jax.random.split(key, 1 + L)

    def rnd(k, shape):
        return jax.random.normal(k, shape, jnp.float32) * s

    layers = []
    for li in range(L):
        lk = jax.random.split(keys[1 + li], 12)
        layers.append({
            'wq_t': rnd(lk[0], (E, E)), 'wk_t': rnd(lk[1], (E, E)), 'wv_t': rnd(lk[2], (E, E)),
            'bq': rnd(lk[3], (1, E)), 'bk': rnd(lk[4], (1, E)), 'bv': rnd(lk[5], (1, E)),
            'wo_t': rnd(lk[6], (E, E)), 'bo': rnd(lk[7], (1, E)),
            'g1': jnp.ones((1, E), jnp.float32), 'be1': jnp.zeros((1, E), jnp.float32),
            'w1_t': rnd(lk[8], (E, F)), 'b1': rnd(lk[9], (1, F)),
            'w2_t': rnd(lk[10], (F, E)), 'b2': rnd(lk[11], (1, E)),
            'g2': jnp.ones((1, E), jnp.float32), 'be2': jnp.zeros((1, E), jnp.float32),
        })
    return {
        'emb': rnd(keys[0], (V, E)),
        'pe': positional_encoding(max_len, E),
        'layers': layers,
        'gf': jnp.ones((1, E), jnp.float32),    # final encoder LayerNorm
        'bf': jnp.zeros((1, E), jnp.float32),
    }


# ----------------------------------------------------------------------------- main
if __name__ == "__main__":
    B, S = 2, 16                   # batch, sequence length
    V, E, F, L, NH = 32, 128, 256, 2, 8   # vocab, d_model, dim_feedforward, layers, heads
    MAX_LEN = 64 + 10              # PositionEncoder(max_len + 10, emb_size)

    key = jax.random.PRNGKey(0)
    k_ids, k_p = jax.random.split(key, 2)

    src = jax.random.randint(k_ids, (S, B), 0, V, jnp.int32)              # [S, B] like PyTorch
    src_mask = jnp.zeros((B, S), dtype=bool).at[1, S - 4:].set(True)      # key padding mask [B, S]
    params = init_params(k_p, V, E, F, L, MAX_LEN)

    out = jax.block_until_ready(
        transformer_encoder_forward(src, src_mask, params, nhead=NH))

    ref = reference_forward(src, src_mask, params, nhead=NH)
    assert out.shape == (S, B, E)
    assert bool(jnp.all(jnp.isfinite(out)))
    # Loose-ish tolerance accounts for the EUP approximate reciprocal in the softmax.
    assert jnp.allclose(out, ref, rtol=1e-2, atol=1e-2), "mismatch vs pure-JAX reference"

    print("KERNEL_OK")
</pallas_src>

<mosaic_0001>
module attributes {stable_mosaic.version = 11 : i64} {
  func.func @embed_kernel(%arg0: i32, %arg1: memref<32xi32, #tpu.memory_space<smem>>, %arg2: memref<1x1x128xf32, #tpu.memory_space<vmem>>, %arg3: memref<1x1x128xf32, #tpu.memory_space<vmem>>, %arg4: memref<1x1x128xf32, #tpu.memory_space<vmem>>) attributes {dimension_semantics = [#tpu.dimension_semantics<arbitrary>], iteration_bounds = array<i64: 32>, scalar_prefetch = 1 : i64, scratch_operands = 0 : i64, tpu.core_type = #tpu.core_type<tc>, window_params = [{transform_indices = @transform_0, window_bounds = array<i64: 1, 1, 128>}, {transform_indices = @transform_1, window_bounds = array<i64: 1, 1, 128>}, {transform_indices = @transform_2, window_bounds = array<i64: 1, 1, 128>}]} {
    %c0 = arith.constant 0 : index
    %c0_0 = arith.constant 0 : index
    %c0_1 = arith.constant 0 : index
    %0 = vector.load %arg2[%c0, %c0_0, %c0_1] : memref<1x1x128xf32, #tpu.memory_space<vmem>>, vector<1x1x128xf32>
    %cst = arith.constant 11.3137083 : f32
    %1 = vector.broadcast %cst : f32 to vector<1x1x128xf32>
    %2 = arith.mulf %0, %1 : vector<1x1x128xf32>
    %c0_2 = arith.constant 0 : index
    %c0_3 = arith.constant 0 : index
    %c0_4 = arith.constant 0 : index
    %3 = vector.load %arg3[%c0_2, %c0_3, %c0_4] : memref<1x1x128xf32, #tpu.memory_space<vmem>>, vector<1x1x128xf32>
    %4 = arith.addf %2, %3 : vector<1x1x128xf32>
    %c0_5 = arith.constant 0 : index
    %c0_6 = arith.constant 0 : index
    %c0_7 = arith.constant 0 : index
    %5 = vector.load %arg4[%c0_5, %c0_6, %c0_7] : memref<1x1x128xf32, #tpu.memory_space<vmem>>, vector<1x1x128xf32>
    tpu.vector_store %arg4[%c0_5, %c0_6, %c0_7], %4 {strides = array<i32>} : memref<1x1x128xf32, #tpu.memory_space<vmem>>, vector<1x1x128xf32>,
    return
  }
  func.func @transform_0(%arg0: i32, %arg1: memref<32xi32, #tpu.memory_space<smem>>) -> (i32, i32, i32) {
    %0 = arith.index_cast %arg0 : i32 to index
    %1 = memref.load %arg1[%0] : memref<32xi32, #tpu.memory_space<smem>>
    %c0_i32 = arith.constant 0 : i32
    %c0_i32_0 = arith.constant 0 : i32
    %c0_i32_1 = arith.constant 0 : i32
    return %1, %c0_i32, %c0_i32_0 : i32, i32, i32
  }
  func.func @transform_1(%arg0: i32, %arg1: memref<32xi32, #tpu.memory_space<smem>>) -> (i32, i32, i32) {
    %c16_i32 = arith.constant 16 : i32
    %c0_i32 = arith.constant 0 : i32
    %0 = arith.cmpi eq, %c16_i32, %c0_i32 : i32
    %c1_i32 = arith.constant 1 : i32
    %1 = arith.select %0, %c1_i32, %c16_i32 : i32
    %2 = arith.remsi %arg0, %1 : i32
    %c0_i32_0 = arith.constant 0 : i32
    %3 = arith.cmpi ne, %2, %c0_i32_0 : i32
    %c0_i32_1 = arith.constant 0 : i32
    %4 = arith.cmpi slt, %2, %c0_i32_1 : i32
    %c0_i32_2 = arith.constant 0 : i32
    %5 = arith.cmpi slt, %1, %c0_i32_2 : i32
    %6 = arith.xori %4, %5 : i1
    %7 = arith.andi %6, %3 : i1
    %8 = arith.addi %2, %1 : i32
    %9 = arith.select %7, %8, %2 : i32
    %c0_i32_3 = arith.constant 0 : i32
    %c0_i32_4 = arith.constant 0 : i32
    %c0_i32_5 = arith.constant 0 : i32
    return %9, %c0_i32_3, %c0_i32_4 : i32, i32, i32
  }
  func.func @transform_2(%arg0: i32, %arg1: memref<32xi32, #tpu.memory_space<smem>>) -> (i32, i32, i32) {
    %c0_i32 = arith.constant 0 : i32
    %c0_i32_0 = arith.constant 0 : i32
    %c0_i32_1 = arith.constant 0 : i32
    return %arg0, %c0_i32, %c0_i32_0 : i32, i32, i32
  }
}

</mosaic_0001>

<llo_original>
// kernel: tpu_custom_call.1
$region0: #{tpu_custom_call.1}
  #allocation0 [shape = 'u32[]', space=smem, size = 0x4, offset = 0x4, fixed_abs, tag = 'smem constant byte address 0x4 - core index']
  #allocation1 [shape = 'u32[144,128]{1,0:T(1,128)}', space=vmem, size = 0x12000, scoped, tag = 'internal scratch']
  #allocation2 [shape = 's32[1]{0}', space=sflag, size = 0x4, scoped, tag = 'scoped memory for tpu_custom_call.1']
  #allocation3 [shape = 'u8[512]{0}', space=smem, size = 0x200, scoped, tag = 'prefetched SMEM operand 0']
  %s0 = inlined_call_operand.hbm [shape: s32[32], index: 0, kind: input, shape index: {}]
  %s1 = inlined_call_operand.hbm [shape: f32[32,1,128], index: 1, kind: input, shape index: {}]
  %s2 = inlined_call_operand.hbm [shape: f32[74,1,128], index: 2, kind: input, shape index: {}]
  %s3 = inlined_call_operand.hbm [shape: f32[32,1,128], index: 3, kind: output, shape index: {}]
  %s4 = sld [smem:[#allocation0]]
  $region49: #{tpu_custom_call.1} parent=0
    _
  %s6 = ssub.s32 1, %s4
  %s7 = scalar_select 0, %s6, %s4
  %9 = dma.hbm_to_smem %s0, 16, [#allocation3], [#allocation2]
  %10 = dma.done [#allocation2], 16
  %11 = sfence
  $region1: #{tpu_custom_call.1} parent=0
    #allocation4 [shape = 'u8[1024]{0}', space=vmem, size = 0x400, scoped, tag = 'input window, operand 1']
    #allocation5 [shape = 's32[2]{0}', space=sflag, size = 0x8, scoped, tag = 'scoped memory for tpu_custom_call.1']
    #allocation6 [shape = 's32[2]{0}', space=sflag, size = 0x8, scoped, tag = 'scoped memory for tpu_custom_call.1']
    #allocation7 [shape = 'u8[1024]{0}', space=vmem, size = 0x400, scoped, tag = 'input window, operand 2']
    #allocation8 [shape = 's32[2]{0}', space=sflag, size = 0x8, scoped, tag = 'scoped memory for tpu_custom_call.1']
    #allocation9 [shape = 'u8[1024]{0}', space=vmem, size = 0x400, scoped, tag = 'output window, operand 0']
    %12 = vsyncpa [#allocation5], 0
    %s13 = scalar_lea.sflag [#allocation5], 1
    %14 = vsyncpa %s13, 0
    %15 = vsyncpa [#allocation8], 0
    %s16 = scalar_lea.sflag [#allocation8], 1
    %17 = vsyncpa %s16, 0
    %18 = vsyncpa [#allocation6], 0
    %s19 = scalar_lea.sflag [#allocation6], 1
    %20 = vsyncpa %s19, 0
    loop: start=0, step=1, limit=34
    $region2: #{tpu_custom_call.1} parent=1 // loop_pre_header
      _
    $region3: #{tpu_custom_call.1} parent=1 // loop_header
      %s22 = sphi 0, %s26
      %p23 = scmp.ge.s32.totalorder %s22, 34
      %s34 = sphi 0, %s36
      %s37 = sphi 0, %s34
      %s38 = sphi 0, %s37
      %s54 = sphi 0, %s38
      %s84 = sphi 0, %s86
      %s87 = sphi 0, %s84
      %s88 = sphi 0, %s87
      %s104 = sphi 0, %s88
      %s110 = sphi 0, %s112
      %s113 = sphi 0, %s110
      %s114 = sphi 0, %s113
      %s130 = sphi 0, %s114
    $region4: #{tpu_custom_call.1} parent=1 // loop_header_branch
      %25 = sbr.rel (%p23) target = $region8
    $region5: #{tpu_custom_call.1} parent=1 // loop_body
      %s27 = ssub.s32 %s22, 1
      %s28 = ssub.s32 %s22, 2
      %s29 = sadd.s32 %s22, 1
      %s30 = sld [smem:[#allocation3 + %s22]]
      %s31 = sld [smem:[#allocation3 + %s29]]
      %s32 = ssub.s32 %s30, %s31
      %p33 = scmp.eq.s32.totalorder %s32, 0
      %s35 = sadd.s32 %s34, 1
      %s36 = scalar_select %p33, %s34, %s35
      %p39 = pneg %p33
      %p40 = scmp.eq.s32.totalorder %s22, 31
      %p41 = por %p39, %p40
      %p42 = scmp.ne.s32.totalorder %s34, %s37
      %p43 = scmp.eq.s32.totalorder %s22, 0
      %p44 = por %p42, %p43
      %p45 = scmp.ne.s32.totalorder %s34, %s37
      %p46 = scmp.eq.s32.totalorder %s27, 31
      %p47 = por %p45, %p46
      %p48 = scmp.ne.s32.totalorder %s37, %s38
      %p49 = scmp.eq.s32.totalorder %s27, 0
      %p50 = por %p48, %p49
      %p51 = scmp.ne.s32.totalorder %s37, %s38
      %p52 = scmp.eq.s32.totalorder %s28, 31
      %p53 = por %p51, %p52
      %p55 = scmp.ne.s32.totalorder %s38, %s54
      %p56 = scmp.eq.s32.totalorder %s28, 0
      %p57 = por %p55, %p56
      %p58 = scmp.lt.s32.totalorder %s22, 0
      %s59 = ssub.s32 0, %s22
      %s60 = scalar_select %p58, %s59, %s22
      %s61 = sand.u32 %s60, 15
      %s62 = ssub.s32 0, %s61
      %s63 = scalar_select %p58, %s62, %s61
      %p64 = scmp.ne.s32.totalorder %s63, 0
      %p65 = scmp.lt.s32.totalorder %s63, 0
      %p66 = pnand %p65, %p64
      %p67 = pneg %p66
      %s68 = sadd.s32 %s63, 16
      %s69 = scalar_select %p67, %s68, %s63
      %p70 = scmp.lt.s32.totalorder %s29, 0
      %s71 = ssub.s32 0, %s29
      %s72 = scalar_select %p70, %s71, %s29
      %s73 = sand.u32 %s72, 15
      %s74 = ssub.s32 0, %s73
      %s75 = scalar_select %p70, %s74, %s73
      %p76 = scmp.ne.s32.totalorder %s75, 0
      %p77 = scmp.lt.s32.totalorder %s75, 0
      %p78 = pnand %p77, %p76
      %p79 = pneg %p78
      %s80 = sadd.s32 %s75, 16
      %s81 = scalar_select %p79, %s80, %s75
      %s82 = ssub.s32 %s69, %s81
      %p83 = scmp.eq.s32.totalorder %s82, 0
      %s85 = sadd.s32 %s84, 1
      %s86 = scalar_select %p83, %s84, %s85
      %p89 = pneg %p83
      %p90 = scmp.eq.s32.totalorder %s22, 31
      %p91 = por %p89, %p90
      %p92 = scmp.ne.s32.totalorder %s84, %s87
      %p93 = scmp.eq.s32.totalorder %s22, 0
      %p94 = por %p92, %p93
      %p95 = scmp.ne.s32.totalorder %s84, %s87
      %p96 = scmp.eq.s32.totalorder %s27, 31
      %p97 = por %p95, %p96
      %p98 = scmp.ne.s32.totalorder %s87, %s88
      %p99 = scmp.eq.s32.totalorder %s27, 0
      %p100 = por %p98, %p99
      %p101 = scmp.ne.s32.totalorder %s87, %s88
      %p102 = scmp.eq.s32.totalorder %s28, 31
      %p103 = por %p101, %p102
      %p105 = scmp.ne.s32.totalorder %s88, %s104
      %p106 = scmp.eq.s32.totalorder %s28, 0
      %p107 = por %p105, %p106
      %s108 = ssub.s32 %s22, %s29
      %p109 = scmp.eq.s32.totalorder %s108, 0
      %s111 = sadd.s32 %s110, 1
      %s112 = scalar_select %p109, %s110, %s111
      %p115 = pneg %p109
      %p116 = scmp.eq.s32.totalorder %s22, 31
      %p117 = por %p115, %p116
      %p118 = scmp.ne.s32.totalorder %s110, %s113
      %p119 = scmp.eq.s32.totalorder %s22, 0
      %p120 = por %p118, %p119
      %p121 = scmp.ne.s32.totalorder %s110, %s113
      %p122 = scmp.eq.s32.totalorder %s27, 31
      %p123 = por %p121, %p122
      %p124 = scmp.ne.s32.totalorder %s113, %s114
      %p125 = scmp.eq.s32.totalorder %s27, 0
      %p126 = por %p124, %p125
      %p127 = scmp.ne.s32.totalorder %s113, %s114
      %p128 = scmp.eq.s32.totalorder %s28, 31
      %p129 = por %p127, %p128
      %p131 = scmp.ne.s32.totalorder %s114, %s130
      %p132 = scmp.eq.s32.totalorder %s28, 0
      %p133 = por %p131, %p132
      %p134 = scmp.le.s32.totalorder 1, %s22
      %p135 = scmp.lt.s32.totalorder %s22, 33
      %p136 = pnand %p134, %p135
      %p137 = pneg %p136
      // Predicated region
      $region9: #{tpu_custom_call.1} parent=5 // pred_check
        _
      $region10: #{tpu_custom_call.1} parent=5 // pred_check_branch
        %139 = sbr.rel (%p136) target = $region12
      $region11: #{tpu_custom_call.1} parent=5 // pred_region
        %s140 = ssub.s32 %s22, 1
      $region12: #{tpu_custom_call.1} parent=5 // pred_fallthru
        _
      %p141 = scmp.lt.s32.totalorder %s22, 32
      // Predicated region
      $region13: #{tpu_custom_call.1} parent=5 // pred_check
        %p142 = pneg %p141
      $region14: #{tpu_custom_call.1} parent=5 // pred_check_branch
        %144 = sbr.rel (%p142) target = $region16
      $region15: #{tpu_custom_call.1} parent=5 // pred_region
        // Predicated region
        $region17: #{tpu_custom_call.1} parent=15 // pred_check
          %p145 = pneg %p44
        $region18: #{tpu_custom_call.1} parent=15 // pred_check_branch
          %147 = sbr.rel (%p145) target = $region20
        $region19: #{tpu_custom_call.1} parent=15 // pred_region
          %s148 = sand.u32 %s34, 1
          %s149 = scalar_lea.sflag [#allocation5], %s148
          %s150 = sand.u32 %s34, 1
          %s151 = scalar_lea.vmem [#allocation4], %s150
          %s152 = sld [smem:[#allocation3 + %s22]]
          %s154 = ssub.s32 16, 16
          %155 = vsyncadd %s149, %s154
          %s156 = smul.addr %s152, 16
          %s157 = scalar_lea.hbm %s1, %s156
          %s159 = sshll.u32 %s151, 4
          %s160 = int_to_ptr.vmem [resolvable:$true] %s159
          %162 = dma.hbm_to_vmem [thread:$0]  %s157, 16, %s160, %s149
        $region20: #{tpu_custom_call.1} parent=15 // pred_fallthru
          _
        // Predicated region
        $region21: #{tpu_custom_call.1} parent=15 // pred_check
          %p163 = pneg %p94
        $region22: #{tpu_custom_call.1} parent=15 // pred_check_branch
          %165 = sbr.rel (%p163) target = $region24
        $region23: #{tpu_custom_call.1} parent=15 // pred_region
          %s166 = sand.u32 %s84, 1
          %s167 = scalar_lea.sflag [#allocation8], %s166
          %s168 = sand.u32 %s84, 1
          %s169 = scalar_lea.vmem [#allocation7], %s168
          %p170 = scmp.lt.s32.totalorder %s22, 0
          %s171 = ssub.s32 0, %s22
          %s172 = scalar_select %p170, %s171, %s22
          %s173 = sand.u32 %s172, 15
          %s174 = ssub.s32 0, %s173
          %s175 = scalar_select %p170, %s174, %s173
          %p176 = scmp.ne.s32.totalorder %s175, 0
          %p177 = scmp.lt.s32.totalorder %s175, 0
          %p178 = pnand %p177, %p176
          %p179 = pneg %p178
          %s180 = sadd.s32 %s175, 16
          %s181 = scalar_select %p179, %s180, %s175
          %s183 = ssub.s32 16, 16
          %184 = vsyncadd %s167, %s183
          %s185 = smul.addr %s181, 16
          %s186 = scalar_lea.hbm %s2, %s185
          %s188 = sshll.u32 %s169, 4
          %s189 = int_to_ptr.vmem [resolvable:$true] %s188
          %191 = dma.hbm_to_vmem [thread:$0]  %s186, 16, %s189, %s167
        $region24: #{tpu_custom_call.1} parent=15 // pred_fallthru
          _
      $region16: #{tpu_custom_call.1} parent=5 // pred_fallthru
        _
      %p192 = scmp.le.s32.totalorder 1, %s22
      %p193 = scmp.lt.s32.totalorder %s22, 33
      %p194 = pnand %p192, %p193
      %p195 = pneg %p194
      // Predicated region
      $region25: #{tpu_custom_call.1} parent=5 // pred_check
        _
      $region26: #{tpu_custom_call.1} parent=5 // pred_check_branch
        %197 = sbr.rel (%p194) target = $region28
      $region27: #{tpu_custom_call.1} parent=5 // pred_region
        %s198 = ssub.s32 %s22, 1
        %s199 = sand.u32 %s37, 1
        %s200 = scalar_lea.sflag [#allocation5], %s199
        %s201 = sand.u32 %s37, 1
        %s202 = scalar_lea.vmem [#allocation4], %s201
        // Predicated region
        $region29: #{tpu_custom_call.1} parent=27 // pred_check
          %p203 = pneg %p50
        $region30: #{tpu_custom_call.1} parent=27 // pred_check_branch
          %205 = sbr.rel (%p203) target = $region32
        $region31: #{tpu_custom_call.1} parent=27 // pred_region
          %206 = dma.done %s200, 16
        $region32: #{tpu_custom_call.1} parent=27 // pred_fallthru
          _
        %s207 = sand.u32 %s87, 1
        %s208 = scalar_lea.sflag [#allocation8], %s207
        %s209 = sand.u32 %s87, 1
        %s210 = scalar_lea.vmem [#allocation7], %s209
        // Predicated region
        $region33: #{tpu_custom_call.1} parent=27 // pred_check
          %p211 = pneg %p100
        $region34: #{tpu_custom_call.1} parent=27 // pred_check_branch
          %213 = sbr.rel (%p211) target = $region36
        $region35: #{tpu_custom_call.1} parent=27 // pred_region
          %214 = dma.done %s208, 16
        $region36: #{tpu_custom_call.1} parent=27 // pred_fallthru
          _
        %s215 = sand.u32 %s37, 1
        %s216 = scalar_lea.sflag [#allocation5], %s215
        %s217 = sand.u32 %s37, 1
        %s218 = scalar_lea.vmem [#allocation4], %s217
        %p219 = pneg %p50
        %p220 = pneg %p47
        %s221 = sand.u32 %s87, 1
        %s222 = scalar_lea.sflag [#allocation8], %s221
        %s223 = sand.u32 %s87, 1
        %s224 = scalar_lea.vmem [#allocation7], %s223
        %p225 = pneg %p100
        %p226 = pneg %p97
        %p227 = pneg %p126
        %p228 = pneg %p123
        %s229 = sand.u32 %s113, 1
        %s230 = scalar_lea.sflag [#allocation6], %s229
        %s231 = sand.u32 %s113, 1
        %s232 = scalar_lea.vmem [#allocation9], %s231
        %s233 = sld [smem:[#allocation3 + %s27]]
        %p234 = scmp.lt.s32.totalorder %s27, 0
        %s235 = ssub.s32 0, %s27
        %s236 = scalar_select %p234, %s235, %s27
        %s237 = sand.u32 %s236, 15
        %s238 = ssub.s32 0, %s237
        %s239 = scalar_select %p234, %s238, %s237
        %p240 = scmp.ne.s32.totalorder %s239, 0
        %p241 = scmp.lt.s32.totalorder %s239, 0
        %p242 = pnand %p241, %p240
        %p243 = pneg %p242
        %s244 = sadd.s32 %s239, 16
        %s245 = scalar_select %p243, %s244, %s239
        %v246 = vld [vmem:[%s202] sm:$0x1]
        %v247 = vmul.f32 %v246, 11.313708
        %v248 = vld [vmem:[%s210] sm:$0x1]
        %v249 = vadd.f32 %v247, %v248
        %250 = vst [vmem:[%s232] sm:$0x1] %v249
        %s251 = sand.u32 %s113, 1
        %s252 = scalar_lea.sflag [#allocation6], %s251
        %s253 = sand.u32 %s113, 1
        %s254 = scalar_lea.vmem [#allocation9], %s253
        // Predicated region
        $region37: #{tpu_custom_call.1} parent=27 // pred_check
          %p255 = pneg %p123
        $region38: #{tpu_custom_call.1} parent=27 // pred_check_branch
          %257 = sbr.rel (%p255) target = $region40
        $region39: #{tpu_custom_call.1} parent=27 // pred_region
          %s259 = ssub.s32 16, 16
          %260 = vsyncadd %s252, %s259
          %s261 = smul.addr %s27, 16
          %s262 = scalar_lea.hbm %s3, %s261
          %s264 = sshll.u32 %s254, 4
          %s265 = int_to_ptr.vmem [resolvable:$true] %s264
          %267 = dma.vmem_to_hbm [thread:$0]  %s265, 16, %s262, %s252
        $region40: #{tpu_custom_call.1} parent=27 // pred_fallthru
          _
      $region28: #{tpu_custom_call.1} parent=5 // pred_fallthru
        _
      %p268 = scmp.le.s32.totalorder 2, %s22
      // Predicated region
      $region41: #{tpu_custom_call.1} parent=5 // pred_check
        %p269 = pneg %p268
      $region42: #{tpu_custom_call.1} parent=5 // pred_check_branch
        %271 = sbr.rel (%p269) target = $region44
      $region43: #{tpu_custom_call.1} parent=5 // pred_region
        %s272 = ssub.s32 %s22, 2
        // Predicated region
        $region45: #{tpu_custom_call.1} parent=43 // pred_check
          %p273 = pneg %p129
        $region46: #{tpu_custom_call.1} parent=43 // pred_check_branch
          %275 = sbr.rel (%p273) target = $region48
        $region47: #{tpu_custom_call.1} parent=43 // pred_region
          %s276 = sand.u32 %s114, 1
          %s277 = scalar_lea.sflag [#allocation6], %s276
          %s278 = sand.u32 %s114, 1
          %s279 = scalar_lea.vmem [#allocation9], %s278
          %280 = dma.done %s277, 16
        $region48: #{tpu_custom_call.1} parent=43 // pred_fallthru
          _
      $region44: #{tpu_custom_call.1} parent=5 // pred_fallthru
        _
    $region6: #{tpu_custom_call.1} parent=1 // loop_footer
      %s26 = sadd.s32 1, %s22
    $region7: #{tpu_custom_call.1} parent=1 // loop_footer_branch
      %21 = sbr.rel target = $region3
    $region8: #{tpu_custom_call.1} parent=1 // loop_exit
      _
    %281 = vsyncpa [#allocation5], 1
    %s282 = scalar_lea.sflag [#allocation5], 1
    %283 = vsyncpa %s282, 1
    %284 = vsyncpa [#allocation8], 1
    %s285 = scalar_lea.sflag [#allocation8], 1
    %286 = vsyncpa %s285, 1
    %287 = vsyncpa [#allocation6], 1
    %s288 = scalar_lea.sflag [#allocation6], 1
    %289 = vsyncpa %s288, 1

</llo_original>
